<compile_context>
chip_gen: v7x
topology: tpu7x:2x2x1
jax: 0.10.0
libtpu: 0.0.40
codegen_flags: <defaults>
</compile_context>

<pallas_src>
import functools

import jax
import jax.numpy as jnp
from jax import lax
from jax.experimental import pallas as pl
from jax.experimental.pallas import tpu as pltpu

LANES = 128
CHUNK = 64                       # rows per inner-loop step: (64,128) f32 = 8 vregs/operand
BLOCK_BYTES = 2 * 1024 * 1024    # 2 MiB per input tile (review: 2-4 MiB sweet spot)
MIN_PALLAS_ELEMS = 1 << 20       # below this, pure-JAX fallback beats kernel launch cost


def _round_up(x, m):
    return (x + m - 1) // m * m


def _masked_mse_kernel(o_ref, t_ref, sum_ref, cnt_ref, *,
                       block_rows, last_full_chunks, last_tail_rows, nblocks):
    i = pl.program_id(0)

    @pl.when(i == 0)
    def _init():
        sum_ref[...] = jnp.zeros_like(sum_ref)
        cnt_ref[...] = jnp.zeros_like(cnt_ref)

    def fold(x):
        # (CHUNK, 128) -> (8, 128): pure VPU adds across vregs, no cross-lane work.
        return x.reshape(CHUNK // 8, 8, LANES).sum(axis=0)

    def chunk_update(s, c, o, t, row_mask=None):
        valid = jnp.logical_not(jnp.isnan(o) | jnp.isnan(t))
        if row_mask is not None:              # only the ragged tail chunk pays for this
            valid = valid & row_mask
        d = jnp.where(valid, o - t, 0.0)
        return s + fold(d * d), c + fold(valid.astype(jnp.int32))

    def accumulate(n_full_chunks, tail_rows):
        # Streaming inner loop: small live vreg set, accumulators stay in vregs.
        def body(j, carry):
            s, c = carry
            r0 = pl.multiple_of(j * CHUNK, CHUNK)
            o = o_ref[pl.ds(r0, CHUNK), :].astype(jnp.float32)
            t = t_ref[pl.ds(r0, CHUNK), :].astype(jnp.float32)
            return chunk_update(s, c, o, t)

        init = (jnp.zeros((8, LANES), jnp.float32),
                jnp.zeros((8, LANES), jnp.int32))
        s, c = lax.fori_loop(0, n_full_chunks, body, init)

        if tail_rows:                          # static: ragged tail of the last block
            r0 = n_full_chunks * CHUNK         # static, still inside the VMEM buffer
            o = o_ref[pl.ds(r0, CHUNK), :].astype(jnp.float32)
            t = t_ref[pl.ds(r0, CHUNK), :].astype(jnp.float32)
            row = lax.broadcasted_iota(jnp.int32, (CHUNK, LANES), 0)
            s, c = chunk_update(s, c, o, t, row_mask=row < tail_rows)

        sum_ref[...] += s
        cnt_ref[...] += c

    if nblocks > 1:
        @pl.when(i < nblocks - 1)
        def _common():
            accumulate(block_rows // CHUNK, 0)

    @pl.when(i == nblocks - 1)
    def _last():
        accumulate(last_full_chunks, last_tail_rows)


def custom_mse_loss(output, target):
    assert output.shape == target.shape, "output/target shapes must match"
    o = output.reshape(-1)
    t = target.reshape(-1)
    n = o.shape[0]
    if n == 0:
        # torch.mean over an empty selection is NaN.
        return jnp.float32(jnp.nan)

    allowed = (jnp.dtype(jnp.float32), jnp.dtype(jnp.bfloat16), jnp.dtype(jnp.float16))
    if o.dtype != t.dtype or jnp.dtype(o.dtype) not in allowed:
        o = o.astype(jnp.float32)
        t = t.astype(jnp.float32)

    if n < MIN_PALLAS_ELEMS:
        # Launch/grid overhead dominates tiny inputs; use XLA's fused reduce.
        o32 = o.astype(jnp.float32)
        t32 = t.astype(jnp.float32)
        valid = jnp.logical_not(jnp.isnan(o32) | jnp.isnan(t32))
        d = jnp.where(valid, o32 - t32, 0.0)
        return jnp.sum(d * d) / jnp.sum(valid.astype(jnp.float32))

    # NaN tail-pad only up to the next multiple of 128 so the flat vector can be
    # viewed lane-major as (rows, 128); lane-aligned inputs stay copy-free.
    rem = n % LANES
    if rem:
        o = jnp.pad(o, (0, LANES - rem), constant_values=jnp.nan)
        t = jnp.pad(t, (0, LANES - rem), constant_values=jnp.nan)
    rows = o.shape[0] // LANES
    o2 = o.reshape(rows, LANES)
    t2 = t.reshape(rows, LANES)

    itemsize = jnp.dtype(o.dtype).itemsize
    block_rows = BLOCK_BYTES // (LANES * itemsize)        # 4096 f32 / 8192 bf16,f16
    block_rows = min(block_rows, _round_up(rows, CHUNK))  # small inputs: single block
    nblocks = pl.cdiv(rows, block_rows)
    last_block_rows = rows - (nblocks - 1) * block_rows
    last_full_chunks = last_block_rows // CHUNK
    last_tail_rows = last_block_rows % CHUNK

    kernel = functools.partial(_masked_mse_kernel,
                               block_rows=block_rows,
                               last_full_chunks=last_full_chunks,
                               last_tail_rows=last_tail_rows,
                               nblocks=nblocks)

    sums, counts = pl.pallas_call(
        kernel,
        out_shape=(jax.ShapeDtypeStruct((8, LANES), jnp.float32),
                   jax.ShapeDtypeStruct((8, LANES), jnp.int32)),
        grid_spec=pltpu.PrefetchScalarGridSpec(
            num_scalar_prefetch=0,
            grid=(nblocks,),
            in_specs=[pl.BlockSpec((block_rows, LANES), lambda i: (i, 0)),
                      pl.BlockSpec((block_rows, LANES), lambda i: (i, 0))],
            out_specs=[pl.BlockSpec((8, LANES), lambda i: (0, 0)),
                       pl.BlockSpec((8, LANES), lambda i: (0, 0))],
        ),
        compiler_params=pltpu.CompilerParams(
            dimension_semantics=("arbitrary",),
            vmem_limit_bytes=32 * 1024 * 1024),
    )(o2, t2)

    total_sum = jnp.sum(sums)
    # int32 count sum is exact up to 2^31-1 valid elements; cast only for divide.
    total_cnt = jnp.sum(counts).astype(jnp.float32)
    # 0/0 -> NaN reproduces torch.mean over an empty (all-NaN) selection.
    return total_sum / total_cnt


def _reference(output, target):
    o = output.astype(jnp.float32)
    t = target.astype(jnp.float32)
    valid = jnp.logical_not(jnp.isnan(o) | jnp.isnan(t))
    d = jnp.where(valid, o - t, 0.0)
    return jnp.sum(d * d) / jnp.sum(valid.astype(jnp.float32))


if __name__ == "__main__":
    key = jax.random.PRNGKey(0)
    cases = [
        ((2, 4, 16, 16), jnp.float32),   # tiny: pure-JAX fast path
        ((2000,), jnp.float32),          # tiny ragged: fast path
        ((2048, 640), jnp.float32),      # Pallas path: 3 blocks, ragged last block
        ((2048, 640), jnp.bfloat16),     # Pallas path: native bf16 streaming (8192-row tiles)
    ]
    for shape, dtype in cases:
        key, k1, k2, k3, k4 = jax.random.split(key, 5)
        output = jax.random.normal(k1, shape, dtype=jnp.float32)
        target = jax.random.normal(k2, shape, dtype=jnp.float32)
        # Inject ~10% NaNs into each tensor at deterministic positions.
        output = jnp.where(jax.random.uniform(k3, shape) < 0.1, jnp.nan, output)
        target = jnp.where(jax.random.uniform(k4, shape) < 0.1, jnp.nan, target)
        output = output.astype(dtype)
        target = target.astype(dtype)

        loss = jax.block_until_ready(custom_mse_loss(output, target))
        ref = jax.block_until_ready(_reference(output, target))
        assert jnp.isfinite(loss), ("kernel produced non-finite loss", shape, dtype)
        assert jnp.allclose(loss, ref, rtol=1e-4, atol=1e-6), (shape, dtype, loss, ref)
    print("KERNEL_OK")
</pallas_src>

<mosaic_0001>
module attributes {stable_mosaic.version = 11 : i64} {
  func.func @_masked_mse_kernel(%arg0: i32, %arg1: memref<4096x128xf32, #tpu.memory_space<vmem>>, %arg2: memref<4096x128xf32, #tpu.memory_space<vmem>>, %arg3: memref<8x128xf32, #tpu.memory_space<vmem>>, %arg4: memref<8x128xi32, #tpu.memory_space<vmem>>) attributes {dimension_semantics = [#tpu.dimension_semantics<arbitrary>], iteration_bounds = array<i64: 3>, scalar_prefetch = 0 : i64, scratch_operands = 0 : i64, tpu.core_type = #tpu.core_type<tc>, window_params = [{transform_indices = @transform_0, window_bounds = array<i64: 4096, 128>}, {transform_indices = @transform_1, window_bounds = array<i64: 4096, 128>}, {pipeline_mode = #tpu.pipeline_mode<synchronous>, transform_indices = @transform_2, window_bounds = array<i64: 8, 128>}, {pipeline_mode = #tpu.pipeline_mode<synchronous>, transform_indices = @transform_3, window_bounds = array<i64: 8, 128>}]} {
    %c0_i32 = arith.constant 0 : i32
    %0 = arith.cmpi eq, %arg0, %c0_i32 : i32
    %1 = arith.extui %0 : i1 to i32
    %c0_i32_0 = arith.constant 0 : i32
    %2 = arith.cmpi ne, %1, %c0_i32_0 : i32
    scf.if %2 {
      %cst = arith.constant 0.000000e+00 : f32
      %9 = vector.broadcast %cst : f32 to vector<8x128xf32>
      %c0 = arith.constant 0 : index
      %c0_4 = arith.constant 0 : index
      %10 = vector.load %arg3[%c0, %c0_4] : memref<8x128xf32, #tpu.memory_space<vmem>>, vector<8x128xf32>
      tpu.vector_store %arg3[%c0, %c0_4], %9 {strides = array<i32>} : memref<8x128xf32, #tpu.memory_space<vmem>>, vector<8x128xf32>,
      %c0_i32_5 = arith.constant 0 : i32
      %11 = vector.broadcast %c0_i32_5 : i32 to vector<8x128xi32>
      %c0_6 = arith.constant 0 : index
      %c0_7 = arith.constant 0 : index
      %12 = vector.load %arg4[%c0_6, %c0_7] : memref<8x128xi32, #tpu.memory_space<vmem>>, vector<8x128xi32>
      tpu.vector_store %arg4[%c0_6, %c0_7], %11 {strides = array<i32>} : memref<8x128xi32, #tpu.memory_space<vmem>>, vector<8x128xi32>,
    } else {
    }
    %c2_i32 = arith.constant 2 : i32
    %3 = arith.cmpi slt, %arg0, %c2_i32 : i32
    %4 = arith.extui %3 : i1 to i32
    %c0_i32_1 = arith.constant 0 : i32
    %5 = arith.cmpi ne, %4, %c0_i32_1 : i32
    scf.if %5 {
      %cst = arith.constant 0.000000e+00 : f32
      %9 = vector.broadcast %cst : f32 to vector<8x128xf32>
      %c0_i32_4 = arith.constant 0 : i32
      %10 = vector.broadcast %c0_i32_4 : i32 to vector<8x128xi32>
      %c0_i32_5 = arith.constant 0 : i32
      %c64_i32 = arith.constant 64 : i32
      %11 = arith.addi %c0_i32_5, %c64_i32 : i32
      %c1_i32 = arith.constant 1 : i32
      %12:2 = scf.for %arg5 = %c0_i32_5 to %11 step %c1_i32 iter_args(%arg6 = %9, %arg7 = %10) -> (vector<8x128xf32>, vector<8x128xi32>)  : i32 {
        %c64_i32_14 = arith.constant 64 : i32
        %19 = arith.muli %arg5, %c64_i32_14 : i32
        %20 = tpu.assume_multiple %19, 64 : i32
        %21 = arith.index_cast %20 : i32 to index
        %c0_15 = arith.constant 0 : index
        %22 = vector.load %arg1[%21, %c0_15] : memref<4096x128xf32, #tpu.memory_space<vmem>>, vector<64x128xf32>
        %23 = arith.index_cast %20 : i32 to index
        %c0_16 = arith.constant 0 : index
        %24 = vector.load %arg2[%23, %c0_16] : memref<4096x128xf32, #tpu.memory_space<vmem>>, vector<64x128xf32>
        %25 = arith.cmpf one, %22, %22 : vector<64x128xf32>
        %26 = arith.cmpf one, %24, %24 : vector<64x128xf32>
        %27 = arith.ori %25, %26 : vector<64x128xi1>
        %cst_17 = arith.constant dense<true> : vector<64x128xi1>
        %28 = arith.xori %27, %cst_17 : vector<64x128xi1>
        %29 = arith.subf %22, %24 : vector<64x128xf32>
        %cst_18 = arith.constant 0.000000e+00 : f32
        %30 = vector.broadcast %cst_18 : f32 to vector<64x128xf32>
        %31 = arith.select %28, %29, %30 : vector<64x128xi1>, vector<64x128xf32>
        %32 = arith.mulf %31, %31 : vector<64x128xf32>
        %33 = vector.shape_cast %32 : vector<64x128xf32> to vector<8x8x128xf32>
        %cst_19 = arith.constant dense<0.000000e+00> : vector<8x128xf32>
        %34 = vector.multi_reduction <add>, %33, %cst_19 [0] : vector<8x8x128xf32> to vector<8x128xf32>
        %35 = arith.addf %arg6, %34 : vector<8x128xf32>
        %36 = arith.extui %28 : vector<64x128xi1> to vector<64x128xi32>
        %37 = vector.shape_cast %36 : vector<64x128xi32> to vector<8x8x128xi32>
        %cst_20 = arith.constant dense<0> : vector<8x128xi32>
        %38 = vector.multi_reduction <add>, %37, %cst_20 [0] : vector<8x8x128xi32> to vector<8x128xi32>
        %39 = arith.addi %arg7, %38 : vector<8x128xi32>
        scf.yield %35, %39 : vector<8x128xf32>, vector<8x128xi32>
      }
      %c64_i32_6 = arith.constant 64 : i32
      %c0 = arith.constant 0 : index
      %c0_7 = arith.constant 0 : index
      %13 = vector.load %arg3[%c0, %c0_7] : memref<8x128xf32, #tpu.memory_space<vmem>>, vector<8x128xf32>
      %14 = arith.addf %13, %12#0 : vector<8x128xf32>
      %c0_8 = arith.constant 0 : index
      %c0_9 = arith.constant 0 : index
      %15 = vector.load %arg3[%c0_8, %c0_9] : memref<8x128xf32, #tpu.memory_space<vmem>>, vector<8x128xf32>
      tpu.vector_store %arg3[%c0_8, %c0_9], %14 {strides = array<i32>} : memref<8x128xf32, #tpu.memory_space<vmem>>, vector<8x128xf32>,
      %c0_10 = arith.constant 0 : index
      %c0_11 = arith.constant 0 : index
      %16 = vector.load %arg4[%c0_10, %c0_11] : memref<8x128xi32, #tpu.memory_space<vmem>>, vector<8x128xi32>
      %17 = arith.addi %16, %12#1 : vector<8x128xi32>
      %c0_12 = arith.constant 0 : index
      %c0_13 = arith.constant 0 : index
      %18 = vector.load %arg4[%c0_12, %c0_13] : memref<8x128xi32, #tpu.memory_space<vmem>>, vector<8x128xi32>
      tpu.vector_store %arg4[%c0_12, %c0_13], %17 {strides = array<i32>} : memref<8x128xi32, #tpu.memory_space<vmem>>, vector<8x128xi32>,
    } else {
    }
    %c2_i32_2 = arith.constant 2 : i32
    %6 = arith.cmpi eq, %arg0, %c2_i32_2 : i32
    %7 = arith.extui %6 : i1 to i32
    %c0_i32_3 = arith.constant 0 : i32
    %8 = arith.cmpi ne, %7, %c0_i32_3 : i32
    scf.if %8 {
      %cst = arith.constant 0.000000e+00 : f32
      %9 = vector.broadcast %cst : f32 to vector<8x128xf32>
      %c0_i32_4 = arith.constant 0 : i32
      %10 = vector.broadcast %c0_i32_4 : i32 to vector<8x128xi32>
      %c0_i32_5 = arith.constant 0 : i32
      %c32_i32 = arith.constant 32 : i32
      %11 = arith.addi %c0_i32_5, %c32_i32 : i32
      %c1_i32 = arith.constant 1 : i32
      %12:2 = scf.for %arg5 = %c0_i32_5 to %11 step %c1_i32 iter_args(%arg6 = %9, %arg7 = %10) -> (vector<8x128xf32>, vector<8x128xi32>)  : i32 {
        %c64_i32 = arith.constant 64 : i32
        %19 = arith.muli %arg5, %c64_i32 : i32
        %20 = tpu.assume_multiple %19, 64 : i32
        %21 = arith.index_cast %20 : i32 to index
        %c0_14 = arith.constant 0 : index
        %22 = vector.load %arg1[%21, %c0_14] : memref<4096x128xf32, #tpu.memory_space<vmem>>, vector<64x128xf32>
        %23 = arith.index_cast %20 : i32 to index
        %c0_15 = arith.constant 0 : index
        %24 = vector.load %arg2[%23, %c0_15] : memref<4096x128xf32, #tpu.memory_space<vmem>>, vector<64x128xf32>
        %25 = arith.cmpf one, %22, %22 : vector<64x128xf32>
        %26 = arith.cmpf one, %24, %24 : vector<64x128xf32>
        %27 = arith.ori %25, %26 : vector<64x128xi1>
        %cst_16 = arith.constant dense<true> : vector<64x128xi1>
        %28 = arith.xori %27, %cst_16 : vector<64x128xi1>
        %29 = arith.subf %22, %24 : vector<64x128xf32>
        %cst_17 = arith.constant 0.000000e+00 : f32
        %30 = vector.broadcast %cst_17 : f32 to vector<64x128xf32>
        %31 = arith.select %28, %29, %30 : vector<64x128xi1>, vector<64x128xf32>
        %32 = arith.mulf %31, %31 : vector<64x128xf32>
        %33 = vector.shape_cast %32 : vector<64x128xf32> to vector<8x8x128xf32>
        %cst_18 = arith.constant dense<0.000000e+00> : vector<8x128xf32>
        %34 = vector.multi_reduction <add>, %33, %cst_18 [0] : vector<8x8x128xf32> to vector<8x128xf32>
        %35 = arith.addf %arg6, %34 : vector<8x128xf32>
        %36 = arith.extui %28 : vector<64x128xi1> to vector<64x128xi32>
        %37 = vector.shape_cast %36 : vector<64x128xi32> to vector<8x8x128xi32>
        %cst_19 = arith.constant dense<0> : vector<8x128xi32>
        %38 = vector.multi_reduction <add>, %37, %cst_19 [0] : vector<8x8x128xi32> to vector<8x128xi32>
        %39 = arith.addi %arg7, %38 : vector<8x128xi32>
        scf.yield %35, %39 : vector<8x128xf32>, vector<8x128xi32>
      }
      %c32_i32_6 = arith.constant 32 : i32
      %c0 = arith.constant 0 : index
      %c0_7 = arith.constant 0 : index
      %13 = vector.load %arg3[%c0, %c0_7] : memref<8x128xf32, #tpu.memory_space<vmem>>, vector<8x128xf32>
      %14 = arith.addf %13, %12#0 : vector<8x128xf32>
      %c0_8 = arith.constant 0 : index
      %c0_9 = arith.constant 0 : index
      %15 = vector.load %arg3[%c0_8, %c0_9] : memref<8x128xf32, #tpu.memory_space<vmem>>, vector<8x128xf32>
      tpu.vector_store %arg3[%c0_8, %c0_9], %14 {strides = array<i32>} : memref<8x128xf32, #tpu.memory_space<vmem>>, vector<8x128xf32>,
      %c0_10 = arith.constant 0 : index
      %c0_11 = arith.constant 0 : index
      %16 = vector.load %arg4[%c0_10, %c0_11] : memref<8x128xi32, #tpu.memory_space<vmem>>, vector<8x128xi32>
      %17 = arith.addi %16, %12#1 : vector<8x128xi32>
      %c0_12 = arith.constant 0 : index
      %c0_13 = arith.constant 0 : index
      %18 = vector.load %arg4[%c0_12, %c0_13] : memref<8x128xi32, #tpu.memory_space<vmem>>, vector<8x128xi32>
      tpu.vector_store %arg4[%c0_12, %c0_13], %17 {strides = array<i32>} : memref<8x128xi32, #tpu.memory_space<vmem>>, vector<8x128xi32>,
    } else {
    }
    return
  }
  func.func @transform_0(%arg0: i32) -> (i32, i32) {
    %c0_i32 = arith.constant 0 : i32
    %c0_i32_0 = arith.constant 0 : i32
    return %arg0, %c0_i32 : i32, i32
  }
  func.func @transform_1(%arg0: i32) -> (i32, i32) {
    %c0_i32 = arith.constant 0 : i32
    %c0_i32_0 = arith.constant 0 : i32
    return %arg0, %c0_i32 : i32, i32
  }
  func.func @transform_2(%arg0: i32) -> (i32, i32) {
    %c0_i32 = arith.constant 0 : i32
    %c0_i32_0 = arith.constant 0 : i32
    %c0_i32_1 = arith.constant 0 : i32
    return %c0_i32, %c0_i32_0 : i32, i32
  }
  func.func @transform_3(%arg0: i32) -> (i32, i32) {
    %c0_i32 = arith.constant 0 : i32
    %c0_i32_0 = arith.constant 0 : i32
    %c0_i32_1 = arith.constant 0 : i32
    return %c0_i32, %c0_i32_0 : i32, i32
  }
}

</mosaic_0001>

<llo_original>
// kernel: tpu_custom_call.1
$region0: #{tpu_custom_call.1}
  #allocation0 [shape = 'u32[]', space=smem, size = 0x4, offset = 0x4, fixed_abs, tag = 'smem constant byte address 0x4 - core index']
  #allocation1 [shape = 'u32[144,128]{1,0:T(1,128)}', space=vmem, size = 0x12000, scoped, tag = 'internal scratch']
  %s0 = inlined_call_operand.hbm [shape: f32[10240,128], index: 0, kind: input, shape index: {}]
  %s1 = inlined_call_operand.hbm [shape: f32[10240,128], index: 1, kind: input, shape index: {}]
  %s2 = inlined_call_operand.hbm [shape: f32[8,128], index: 2, kind: output, shape index: {0}]
  %s3 = inlined_call_operand.hbm [shape: s32[8,128], index: 3, kind: output, shape index: {1}]
  %4 = xla_tuple %s2, %s3
  %s5 = sld [smem:[#allocation0]]
  $region83: #{tpu_custom_call.1} parent=0
    _
  %s7 = ssub.s32 1, %s5
  %s8 = scalar_select 0, %s7, %s5
  $region1: #{tpu_custom_call.1} parent=0
    #allocation2 [shape = 'u8[4194304]{0}', space=vmem, size = 0x400000, scoped, tag = 'input window, operand 0']
    #allocation3 [shape = 's32[2]{0}', space=sflag, size = 0x8, scoped, tag = 'scoped memory for tpu_custom_call.1']
    #allocation4 [shape = 's32[2]{0}', space=sflag, size = 0x8, scoped, tag = 'scoped memory for tpu_custom_call.1']
    #allocation5 [shape = 'u8[4194304]{0}', space=vmem, size = 0x400000, scoped, tag = 'input window, operand 1']
    #allocation6 [shape = 's32[2]{0}', space=sflag, size = 0x8, scoped, tag = 'scoped memory for tpu_custom_call.1']
    #allocation7 [shape = 'u8[4096]{0}', space=vmem, size = 0x1000, scoped, tag = 'output window, operand 0, single buffered']
    #allocation8 [shape = 'u8[4096]{0}', space=vmem, size = 0x1000, scoped, tag = 'output window, operand 1, single buffered']
    #allocation9 [shape = 's32[1]{0}', space=sflag, size = 0x4, scoped, tag = 'scoped memory for tpu_custom_call.1']
    %9 = vsyncpa [#allocation3], 0
    %s10 = scalar_lea.sflag [#allocation3], 1
    %11 = vsyncpa %s10, 0
    %12 = vsyncpa [#allocation6], 0
    %s13 = scalar_lea.sflag [#allocation6], 1
    %14 = vsyncpa %s13, 0
    %15 = vsyncpa [#allocation4], 0
    %16 = vsyncpa [#allocation9], 0
    loop: start=0, step=1, limit=5
    $region2: #{tpu_custom_call.1} parent=1 // loop_pre_header
      _
    $region3: #{tpu_custom_call.1} parent=1 // loop_header
      %s18 = sphi 0, %s22
      %p19 = scmp.ge.s32.totalorder %s18, 5
      %s28 = sphi 0, %s30
      %s31 = sphi 0, %s28
      %s32 = sphi 0, %s31
      %s48 = sphi 0, %s32
      %s54 = sphi 0, %s56
      %s57 = sphi 0, %s54
      %s58 = sphi 0, %s57
      %s74 = sphi 0, %s58
      %s78 = sphi 0, %s78
      %s80 = sphi 0, %s78
      %s81 = sphi 0, %s80
      %s95 = sphi 0, %s81
      %s99 = sphi 0, %s99
      %s101 = sphi 0, %s99
      %s102 = sphi 0, %s101
      %s116 = sphi 0, %s102
    $region4: #{tpu_custom_call.1} parent=1 // loop_header_branch
      %21 = sbr.rel (%p19) target = $region8
    $region5: #{tpu_custom_call.1} parent=1 // loop_body
      %s23 = ssub.s32 %s18, 1
      %s24 = ssub.s32 %s18, 2
      %s25 = sadd.s32 %s18, 1
      %s26 = ssub.s32 %s18, %s25
      %p27 = scmp.eq.s32.totalorder %s26, 0
      %s29 = sadd.s32 %s28, 1
      %s30 = scalar_select %p27, %s28, %s29
      %p33 = pneg %p27
      %p34 = scmp.eq.s32.totalorder %s18, 2
      %p35 = por %p33, %p34
      %p36 = scmp.ne.s32.totalorder %s28, %s31
      %p37 = scmp.eq.s32.totalorder %s18, 0
      %p38 = por %p36, %p37
      %p39 = scmp.ne.s32.totalorder %s28, %s31
      %p40 = scmp.eq.s32.totalorder %s23, 2
      %p41 = por %p39, %p40
      %p42 = scmp.ne.s32.totalorder %s31, %s32
      %p43 = scmp.eq.s32.totalorder %s23, 0
      %p44 = por %p42, %p43
      %p45 = scmp.ne.s32.totalorder %s31, %s32
      %p46 = scmp.eq.s32.totalorder %s24, 2
      %p47 = por %p45, %p46
      %p49 = scmp.ne.s32.totalorder %s32, %s48
      %p50 = scmp.eq.s32.totalorder %s24, 0
      %p51 = por %p49, %p50
      %s52 = ssub.s32 %s18, %s25
      %p53 = scmp.eq.s32.totalorder %s52, 0
      %s55 = sadd.s32 %s54, 1
      %s56 = scalar_select %p53, %s54, %s55
      %p59 = pneg %p53
      %p60 = scmp.eq.s32.totalorder %s18, 2
      %p61 = por %p59, %p60
      %p62 = scmp.ne.s32.totalorder %s54, %s57
      %p63 = scmp.eq.s32.totalorder %s18, 0
      %p64 = por %p62, %p63
      %p65 = scmp.ne.s32.totalorder %s54, %s57
      %p66 = scmp.eq.s32.totalorder %s23, 2
      %p67 = por %p65, %p66
      %p68 = scmp.ne.s32.totalorder %s57, %s58
      %p69 = scmp.eq.s32.totalorder %s23, 0
      %p70 = por %p68, %p69
      %p71 = scmp.ne.s32.totalorder %s57, %s58
      %p72 = scmp.eq.s32.totalorder %s24, 2
      %p73 = por %p71, %p72
      %p75 = scmp.ne.s32.totalorder %s58, %s74
      %p76 = scmp.eq.s32.totalorder %s24, 0
      %p77 = por %p75, %p76
      %s79 = sadd.s32 %s78, 1
      %p82 = scmp.eq.s32.totalorder %s18, 2
      %p83 = scmp.ne.s32.totalorder %s78, %s80
      %p84 = scmp.eq.s32.totalorder %s18, 0
      %p85 = por %p83, %p84
      %p86 = scmp.ne.s32.totalorder %s78, %s80
      %p87 = scmp.eq.s32.totalorder %s23, 2
      %p88 = por %p86, %p87
      %p89 = scmp.ne.s32.totalorder %s80, %s81
      %p90 = scmp.eq.s32.totalorder %s23, 0
      %p91 = por %p89, %p90
      %p92 = scmp.ne.s32.totalorder %s80, %s81
      %p93 = scmp.eq.s32.totalorder %s24, 2
      %p94 = por %p92, %p93
      %p96 = scmp.ne.s32.totalorder %s81, %s95
      %p97 = scmp.eq.s32.totalorder %s24, 0
      %p98 = por %p96, %p97
      %s100 = sadd.s32 %s99, 1
      %p103 = scmp.eq.s32.totalorder %s18, 2
      %p104 = scmp.ne.s32.totalorder %s99, %s101
      %p105 = scmp.eq.s32.totalorder %s18, 0
      %p106 = por %p104, %p105
      %p107 = scmp.ne.s32.totalorder %s99, %s101
      %p108 = scmp.eq.s32.totalorder %s23, 2
      %p109 = por %p107, %p108
      %p110 = scmp.ne.s32.totalorder %s101, %s102
      %p111 = scmp.eq.s32.totalorder %s23, 0
      %p112 = por %p110, %p111
      %p113 = scmp.ne.s32.totalorder %s101, %s102
      %p114 = scmp.eq.s32.totalorder %s24, 2
      %p115 = por %p113, %p114
      %p117 = scmp.ne.s32.totalorder %s102, %s116
      %p118 = scmp.eq.s32.totalorder %s24, 0
      %p119 = por %p117, %p118
      %p120 = scmp.le.s32.totalorder 1, %s18
      %p121 = scmp.lt.s32.totalorder %s18, 4
      %p122 = pnand %p120, %p121
      %p123 = pneg %p122
      // Predicated region
      $region9: #{tpu_custom_call.1} parent=5 // pred_check
        _
      $region10: #{tpu_custom_call.1} parent=5 // pred_check_branch
        %125 = sbr.rel (%p122) target = $region12
      $region11: #{tpu_custom_call.1} parent=5 // pred_region
        %s126 = ssub.s32 %s18, 1
      $region12: #{tpu_custom_call.1} parent=5 // pred_fallthru
        _
      %p127 = scmp.lt.s32.totalorder %s18, 3
      // Predicated region
      $region13: #{tpu_custom_call.1} parent=5 // pred_check
        %p128 = pneg %p127
      $region14: #{tpu_custom_call.1} parent=5 // pred_check_branch
        %130 = sbr.rel (%p128) target = $region16
      $region15: #{tpu_custom_call.1} parent=5 // pred_region
        // Predicated region
        $region17: #{tpu_custom_call.1} parent=15 // pred_check
          %p131 = pneg %p38
        $region18: #{tpu_custom_call.1} parent=15 // pred_check_branch
          %133 = sbr.rel (%p131) target = $region20
        $region19: #{tpu_custom_call.1} parent=15 // pred_region
          %s134 = sand.u32 %s28, 1
          %s135 = scalar_lea.sflag [#allocation3], %s134
          %s136 = sand.u32 %s28, 1
          %s137 = smul.addr %s136, 4096
          %s138 = scalar_lea.vmem [#allocation2], %s137
          %s139 = smul.u32 512, %s18
          %s140 = ssub.s32 1280, %s139
          %p141 = scmp.lt.s32.totalorder %s140, 512
          %s142 = scalar_select %p141, %s140, 512
          %s143 = smul.u32 128, %s142
          %s145 = ssub.s32 65536, %s143
          %146 = vsyncadd %s135, %s145
          %p147 = scmp.ne.s32.totalorder 0, %s143
          %s148 = smul.addr %s139, 128
          %s149 = scalar_lea.hbm %s0, %s148
          %s150 = smul.u32 8, %s142
          %s151 = sshll.u32 %s138, 4
          %s152 = int_to_ptr.vmem [resolvable:$true] %s151
          %s153 = sshll.u32 %s150, 4
          %157 = dma.hbm_to_vmem [thread:$0]  (%p147), %s149, %s153, %s152, %s135, 128, 128, 8
        $region20: #{tpu_custom_call.1} parent=15 // pred_fallthru
          _
        // Predicated region
        $region21: #{tpu_custom_call.1} parent=15 // pred_check
          %p158 = pneg %p64
        $region22: #{tpu_custom_call.1} parent=15 // pred_check_branch
          %160 = sbr.rel (%p158) target = $region24
        $region23: #{tpu_custom_call.1} parent=15 // pred_region
          %s161 = sand.u32 %s54, 1
          %s162 = scalar_lea.sflag [#allocation6], %s161
          %s163 = sand.u32 %s54, 1
          %s164 = smul.addr %s163, 4096
          %s165 = scalar_lea.vmem [#allocation5], %s164
          %s166 = smul.u32 512, %s18
          %s167 = ssub.s32 1280, %s166
          %p168 = scmp.lt.s32.totalorder %s167, 512
          %s169 = scalar_select %p168, %s167, 512
          %s170 = smul.u32 128, %s169
          %s172 = ssub.s32 65536, %s170
          %173 = vsyncadd %s162, %s172
          %p174 = scmp.ne.s32.totalorder 0, %s170
          %s175 = smul.addr %s166, 128
          %s176 = scalar_lea.hbm %s1, %s175
          %s177 = smul.u32 8, %s169
          %s178 = sshll.u32 %s165, 4
          %s179 = int_to_ptr.vmem [resolvable:$true] %s178
          %s180 = sshll.u32 %s177, 4
          %184 = dma.hbm_to_vmem [thread:$0]  (%p174), %s176, %s180, %s179, %s162, 128, 128, 8
        $region24: #{tpu_custom_call.1} parent=15 // pred_fallthru
          _
      $region16: #{tpu_custom_call.1} parent=5 // pred_fallthru
        _
      %p185 = scmp.le.s32.totalorder 1, %s18
      %p186 = scmp.lt.s32.totalorder %s18, 4
      %p187 = pnand %p185, %p186
      %p188 = pneg %p187
      // Predicated region
      $region25: #{tpu_custom_call.1} parent=5 // pred_check
        _
      $region26: #{tpu_custom_call.1} parent=5 // pred_check_branch
        %190 = sbr.rel (%p187) target = $region28
      $region27: #{tpu_custom_call.1} parent=5 // pred_region
        %s191 = ssub.s32 %s18, 1
        %s192 = sand.u32 %s31, 1
        %s193 = scalar_lea.sflag [#allocation3], %s192
        %s194 = sand.u32 %s31, 1
        %s195 = smul.addr %s194, 4096
        %s196 = scalar_lea.vmem [#allocation2], %s195
        // Predicated region
        $region29: #{tpu_custom_call.1} parent=27 // pred_check
          %p197 = pneg %p44
        $region30: #{tpu_custom_call.1} parent=27 // pred_check_branch
          %199 = sbr.rel (%p197) target = $region32
        $region31: #{tpu_custom_call.1} parent=27 // pred_region
          %200 = dma.done %s193, 65536
        $region32: #{tpu_custom_call.1} parent=27 // pred_fallthru
          _
        %s201 = sand.u32 %s57, 1
        %s202 = scalar_lea.sflag [#allocation6], %s201
        %s203 = sand.u32 %s57, 1
        %s204 = smul.addr %s203, 4096
        %s205 = scalar_lea.vmem [#allocation5], %s204
        // Predicated region
        $region33: #{tpu_custom_call.1} parent=27 // pred_check
          %p206 = pneg %p70
        $region34: #{tpu_custom_call.1} parent=27 // pred_check_branch
          %208 = sbr.rel (%p206) target = $region36
        $region35: #{tpu_custom_call.1} parent=27 // pred_region
          %209 = dma.done %s202, 65536
        $region36: #{tpu_custom_call.1} parent=27 // pred_fallthru
          _
        %s210 = sand.u32 %s31, 1
        %s211 = scalar_lea.sflag [#allocation3], %s210
        %s212 = sand.u32 %s31, 1
        %s213 = smul.addr %s212, 4096
        %s214 = scalar_lea.vmem [#allocation2], %s213
        %p215 = pneg %p44
        %p216 = pneg %p41
        %s217 = sand.u32 %s57, 1
        %s218 = scalar_lea.sflag [#allocation6], %s217
        %s219 = sand.u32 %s57, 1
        %s220 = smul.addr %s219, 4096
        %s221 = scalar_lea.vmem [#allocation5], %s220
        %p222 = pneg %p70
        %p223 = pneg %p67
        %p224 = pneg %p91
        %p225 = pneg %p88
        %p226 = pneg %p112
        %p227 = pneg %p109
        %s228 = smul.u32 512, %s23
        %s229 = ssub.s32 1280, %s228
        %p230 = scmp.lt.s32.totalorder %s229, 512
        %s231 = scalar_select %p230, %s229, 512
        %s232 = smul.u32 128, %s231
        %s233 = smul.u32 512, %s23
        %s234 = ssub.s32 1280, %s233
        %p235 = scmp.lt.s32.totalorder %s234, 512
        %s236 = scalar_select %p235, %s234, 512
        %s237 = smul.u32 128, %s236
        %p238 = scmp.eq.s32.totalorder %s23, 0
        // Predicated region
        $region37: #{tpu_custom_call.1} parent=27 // pred_check
          %p239 = pneg %p238
        $region38: #{tpu_custom_call.1} parent=27 // pred_check_branch
          %241 = sbr.rel (%p239) target = $region40
        $region39: #{tpu_custom_call.1} parent=27 // pred_region
          %242 = vst [vmem:[#allocation7] sm:$0xff] 0.0
          %243 = vst [vmem:[#allocation8] sm:$0xff] 0
        $region40: #{tpu_custom_call.1} parent=27 // pred_fallthru
          _
        %p244 = scmp.lt.s32.totalorder %s23, 2
        // Predicated region
        $region41: #{tpu_custom_call.1} parent=27 // pred_check
          %p245 = pneg %p244
        $region42: #{tpu_custom_call.1} parent=27 // pred_check_branch
          %247 = sbr.rel (%p245) target = $region44
        $region43: #{tpu_custom_call.1} parent=27 // pred_region
          loop: start=0, step=1, limit=64
          $region45: #{tpu_custom_call.1} parent=43 // loop_pre_header
            _
          $region46: #{tpu_custom_call.1} parent=43 // loop_header
            %s249 = sphi 0, %s253
            %p250 = scmp.ge.s32.totalorder %s249, 64
            %v254 = vphi 0.0, %v338
            %v255 = vphi 0, %v354
          $region47: #{tpu_custom_call.1} parent=43 // loop_header_branch
            %252 = sbr.rel (%p250) target = $region51
          $region48: #{tpu_custom_call.1} parent=43 // loop_body
            %s256 = smul.u32 %s249, 64
            %s257 = scalar_lea.vmem %s196, %s256 [#allocation2]
            %v258 = vld [vmem:[%s257] sm:$0xff]
            %v259 = vld [vmem:[%s257 + $0x8] sm:$0xff]
            %v260 = vld [vmem:[%s257 + $0x10] sm:$0xff]
            %v261 = vld [vmem:[%s257 + $0x18] sm:$0xff]
            %v262 = vld [vmem:[%s257 + $0x20] sm:$0xff]
            %v263 = vld [vmem:[%s257 + $0x28] sm:$0xff]
            %v264 = vld [vmem:[%s257 + $0x30] sm:$0xff]
            %v265 = vld [vmem:[%s257 + $0x38] sm:$0xff]
            %s266 = scalar_lea.vmem %s205, %s256 [#allocation5]
            %v267 = vld [vmem:[%s266] sm:$0xff]
            %v268 = vld [vmem:[%s266 + $0x8] sm:$0xff]
            %v269 = vld [vmem:[%s266 + $0x10] sm:$0xff]
            %v270 = vld [vmem:[%s266 + $0x18] sm:$0xff]
            %v271 = vld [vmem:[%s266 + $0x20] sm:$0xff]
            %v272 = vld [vmem:[%s266 + $0x28] sm:$0xff]
            %v273 = vld [vmem:[%s266 + $0x30] sm:$0xff]
            %v274 = vld [vmem:[%s266 + $0x38] sm:$0xff]
            %vm275 = vcmp.ne.f32.partialorder %v258, %v258
            %vm276 = vcmp.ne.f32.partialorder %v259, %v259
            %vm277 = vcmp.ne.f32.partialorder %v260, %v260
            %vm278 = vcmp.ne.f32.partialorder %v261, %v261
            %vm279 = vcmp.ne.f32.partialorder %v262, %v262
            %vm280 = vcmp.ne.f32.partialorder %v263, %v263
            %vm281 = vcmp.ne.f32.partialorder %v264, %v264
            %vm282 = vcmp.ne.f32.partialorder %v265, %v265
            %vm283 = vcmp.ne.f32.partialorder %v267, %v267
            %vm284 = vcmp.ne.f32.partialorder %v268, %v268
            %vm285 = vcmp.ne.f32.partialorder %v269, %v269
            %vm286 = vcmp.ne.f32.partialorder %v270, %v270
            %vm287 = vcmp.ne.f32.partialorder %v271, %v271
            %vm288 = vcmp.ne.f32.partialorder %v272, %v272
            %vm289 = vcmp.ne.f32.partialorder %v273, %v273
            %vm290 = vcmp.ne.f32.partialorder %v274, %v274
            %vm291 = vmor %vm275, %vm283
            %vm292 = vmor %vm276, %vm284
            %vm293 = vmor %vm277, %vm285
            %vm294 = vmor %vm278, %vm286
            %vm295 = vmor %vm279, %vm287
            %vm296 = vmor %vm280, %vm288
            %vm297 = vmor %vm281, %vm289
            %vm298 = vmor %vm282, %vm290
            %vm299 = vmxor %vm291, 1
            %vm300 = vmxor %vm292, 1
            %vm301 = vmxor %vm293, 1
            %vm302 = vmxor %vm294, 1
            %vm303 = vmxor %vm295, 1
            %vm304 = vmxor %vm296, 1
            %vm305 = vmxor %vm297, 1
            %vm306 = vmxor %vm298, 1
            %v307 = vsub.f32 %v258, %v267
            %v308 = vsub.f32 %v259, %v268
            %v309 = vsub.f32 %v260, %v269
            %v310 = vsub.f32 %v261, %v270
            %v311 = vsub.f32 %v262, %v271
            %v312 = vsub.f32 %v263, %v272
            %v313 = vsub.f32 %v264, %v273
            %v314 = vsub.f32 %v265, %v274
            %v315 = vsel %vm299, %v307, 0.0
            %v316 = vsel %vm300, %v308, 0.0
            %v317 = vsel %vm301, %v309, 0.0
            %v318 = vsel %vm302, %v310, 0.0
            %v319 = vsel %vm303, %v311, 0.0
            %v320 = vsel %vm304, %v312, 0.0
            %v321 = vsel %vm305, %v313, 0.0
            %v322 = vsel %vm306, %v314, 0.0
            %v323 = vmul.f32 %v315, %v315
            %v324 = vmul.f32 %v316, %v316
            %v325 = vmul.f32 %v317, %v317
            %v326 = vmul.f32 %v318, %v318
            %v327 = vmul.f32 %v319, %v319
            %v328 = vmul.f32 %v320, %v320
            %v329 = vmul.f32 %v321, %v321
            %v330 = vmul.f32 %v322, %v322
            %v331 = vadd.f32 %v323, %v324
            %v332 = vadd.f32 %v331, %v325
            %v333 = vadd.f32 %v332, %v326
            %v334 = vadd.f32 %v333, %v327
            %v335 = vadd.f32 %v334, %v328
            %v336 = vadd.f32 %v335, %v329
            %v337 = vadd.f32 %v336, %v330
            %v338 = vadd.f32 %v254, %v337
            %v339 = vsel %vm299, 1, 0
            %v340 = vsel %vm300, 1, 0
            %v341 = vsel %vm301, 1, 0
            %v342 = vsel %vm302, 1, 0
            %v343 = vsel %vm303, 1, 0
            %v344 = vsel %vm304, 1, 0
            %v345 = vsel %vm305, 1, 0
            %v346 = vsel %vm306, 1, 0
            %v347 = vadd.s32 %v339, %v343
            %v348 = vadd.s32 %v340, %v344
            %v349 = vadd.s32 %v341, %v345
            %v350 = vadd.s32 %v342, %v346
            %v351 = vadd.s32 %v347, %v348
            %v352 = vadd.s32 %v349, %v350
            %v353 = vadd.s32 %v351, %v352
            %v354 = vadd.s32 %v255, %v353
          $region49: #{tpu_custom_call.1} parent=43 // loop_footer
            %s253 = sadd.s32 1, %s249
          $region50: #{tpu_custom_call.1} parent=43 // loop_footer_branch
            %248 = sbr.rel target = $region46
          $region51: #{tpu_custom_call.1} parent=43 // loop_exit
            _
          %v355 = vld [vmem:[#allocation7] sm:$0xff]
          %v356 = vadd.f32 %v355, %v254
          %357 = vst [vmem:[#allocation7] sm:$0xff] %v356
          %v358 = vld [vmem:[#allocation8] sm:$0xff]
          %v359 = vadd.s32 %v358, %v255
          %360 = vst [vmem:[#allocation8] sm:$0xff] %v359
        $region44: #{tpu_custom_call.1} parent=27 // pred_fallthru
          _
        %p361 = scmp.eq.s32.totalorder %s23, 2
        // Predicated region
        $region52: #{tpu_custom_call.1} parent=27 // pred_check
          %p362 = pneg %p361
        $region53: #{tpu_custom_call.1} parent=27 // pred_check_branch
          %364 = sbr.rel (%p362) target = $region55
        $region54: #{tpu_custom_call.1} parent=27 // pred_region
          loop: start=0, step=1, limit=32
          $region56: #{tpu_custom_call.1} parent=54 // loop_pre_header
            _
          $region57: #{tpu_custom_call.1} parent=54 // loop_header
            %s366 = sphi 0, %s370
            %p367 = scmp.ge.s32.totalorder %s366, 32
            %v371 = vphi 0.0, %v455
            %v372 = vphi 0, %v471
          $region58: #{tpu_custom_call.1} parent=54 // loop_header_branch
            %369 = sbr.rel (%p367) target = $region62
          $region59: #{tpu_custom_call.1} parent=54 // loop_body
            %s373 = smul.u32 %s366, 64
            %s374 = scalar_lea.vmem %s196, %s373 [#allocation2]
            %v375 = vld [vmem:[%s374] sm:$0xff]
            %v376 = vld [vmem:[%s374 + $0x8] sm:$0xff]
            %v377 = vld [vmem:[%s374 + $0x10] sm:$0xff]
            %v378 = vld [vmem:[%s374 + $0x18] sm:$0xff]
            %v379 = vld [vmem:[%s374 + $0x20] sm:$0xff]
            %v380 = vld [vmem:[%s374 + $0x28] sm:$0xff]
            %v381 = vld [vmem:[%s374 + $0x30] sm:$0xff]
            %v382 = vld [vmem:[%s374 + $0x38] sm:$0xff]
            %s383 = scalar_lea.vmem %s205, %s373 [#allocation5]
            %v384 = vld [vmem:[%s383] sm:$0xff]
            %v385 = vld [vmem:[%s383 + $0x8] sm:$0xff]
            %v386 = vld [vmem:[%s383 + $0x10] sm:$0xff]
            %v387 = vld [vmem:[%s383 + $0x18] sm:$0xff]
            %v388 = vld [vmem:[%s383 + $0x20] sm:$0xff]
            %v389 = vld [vmem:[%s383 + $0x28] sm:$0xff]
            %v390 = vld [vmem:[%s383 + $0x30] sm:$0xff]
            %v391 = vld [vmem:[%s383 + $0x38] sm:$0xff]
            %vm392 = vcmp.ne.f32.partialorder %v375, %v375
            %vm393 = vcmp.ne.f32.partialorder %v376, %v376
            %vm394 = vcmp.ne.f32.partialorder %v377, %v377
            %vm395 = vcmp.ne.f32.partialorder %v378, %v378
            %vm396 = vcmp.ne.f32.partialorder %v379, %v379
            %vm397 = vcmp.ne.f32.partialorder %v380, %v380
            %vm398 = vcmp.ne.f32.partialorder %v381, %v381
            %vm399 = vcmp.ne.f32.partialorder %v382, %v382
            %vm400 = vcmp.ne.f32.partialorder %v384, %v384
            %vm401 = vcmp.ne.f32.partialorder %v385, %v385
            %vm402 = vcmp.ne.f32.partialorder %v386, %v386
            %vm403 = vcmp.ne.f32.partialorder %v387, %v387
            %vm404 = vcmp.ne.f32.partialorder %v388, %v388
            %vm405 = vcmp.ne.f32.partialorder %v389, %v389
            %vm406 = vcmp.ne.f32.partialorder %v390, %v390
            %vm407 = vcmp.ne.f32.partialorder %v391, %v391
            %vm408 = vmor %vm392, %vm400
            %vm409 = vmor %vm393, %vm401
            %vm410 = vmor %vm394, %vm402
            %vm411 = vmor %vm395, %vm403
            %vm412 = vmor %vm396, %vm404
            %vm413 = vmor %vm397, %vm405
            %vm414 = vmor %vm398, %vm406
            %vm415 = vmor %vm399, %vm407
            %vm416 = vmxor %vm408, 1
            %vm417 = vmxor %vm409, 1
            %vm418 = vmxor %vm410, 1
            %vm419 = vmxor %vm411, 1
            %vm420 = vmxor %vm412, 1
            %vm421 = vmxor %vm413, 1
            %vm422 = vmxor %vm414, 1
            %vm423 = vmxor %vm415, 1
            %v424 = vsub.f32 %v375, %v384
            %v425 = vsub.f32 %v376, %v385
            %v426 = vsub.f32 %v377, %v386
            %v427 = vsub.f32 %v378, %v387
            %v428 = vsub.f32 %v379, %v388
            %v429 = vsub.f32 %v380, %v389
            %v430 = vsub.f32 %v381, %v390
            %v431 = vsub.f32 %v382, %v391
            %v432 = vsel %vm416, %v424, 0.0
            %v433 = vsel %vm417, %v425, 0.0
            %v434 = vsel %vm418, %v426, 0.0
            %v435 = vsel %vm419, %v427, 0.0
            %v436 = vsel %vm420, %v428, 0.0
            %v437 = vsel %vm421, %v429, 0.0
            %v438 = vsel %vm422, %v430, 0.0
            %v439 = vsel %vm423, %v431, 0.0
            %v440 = vmul.f32 %v432, %v432
            %v441 = vmul.f32 %v433, %v433
            %v442 = vmul.f32 %v434, %v434
            %v443 = vmul.f32 %v435, %v435
            %v444 = vmul.f32 %v436, %v436
            %v445 = vmul.f32 %v437, %v437
            %v446 = vmul.f32 %v438, %v438
            %v447 = vmul.f32 %v439, %v439
            %v448 = vadd.f32 %v440, %v441
            %v449 = vadd.f32 %v448, %v442
            %v450 = vadd.f32 %v449, %v443
            %v451 = vadd.f32 %v450, %v444
            %v452 = vadd.f32 %v451, %v445
            %v453 = vadd.f32 %v452, %v446
            %v454 = vadd.f32 %v453, %v447
            %v455 = vadd.f32 %v371, %v454
            %v456 = vsel %vm416, 1, 0
            %v457 = vsel %vm417, 1, 0
            %v458 = vsel %vm418, 1, 0
            %v459 = vsel %vm419, 1, 0
            %v460 = vsel %vm420, 1, 0
            %v461 = vsel %vm421, 1, 0
            %v462 = vsel %vm422, 1, 0
            %v463 = vsel %vm423, 1, 0
            %v464 = vadd.s32 %v456, %v460
            %v465 = vadd.s32 %v457, %v461
            %v466 = vadd.s32 %v458, %v462
            %v467 = vadd.s32 %v459, %v463
            %v468 = vadd.s32 %v464, %v465
            %v469 = vadd.s32 %v466, %v467
            %v470 = vadd.s32 %v468, %v469
            %v471 = vadd.s32 %v372, %v470
          $region60: #{tpu_custom_call.1} parent=54 // loop_footer
            %s370 = sadd.s32 1, %s366
          $region61: #{tpu_custom_call.1} parent=54 // loop_footer_branch
            %365 = sbr.rel target = $region57
          $region62: #{tpu_custom_call.1} parent=54 // loop_exit
            _
          %v472 = vld [vmem:[#allocation7] sm:$0xff]
          %v473 = vadd.f32 %v472, %v371
          %474 = vst [vmem:[#allocation7] sm:$0xff] %v473
          %v475 = vld [vmem:[#allocation8] sm:$0xff]
          %v476 = vadd.s32 %v475, %v372
          %477 = vst [vmem:[#allocation8] sm:$0xff] %v476
        $region55: #{tpu_custom_call.1} parent=27 // pred_fallthru
          _
        // Predicated region
        $region63: #{tpu_custom_call.1} parent=27 // pred_check
          %p478 = pneg %p88
        $region64: #{tpu_custom_call.1} parent=27 // pred_check_branch
          %480 = sbr.rel (%p478) target = $region66
        $region65: #{tpu_custom_call.1} parent=27 // pred_region
          %s482 = ssub.s32 128, 128
          %483 = vsyncadd [#allocation4], %s482
          %s485 = sshll.u32 [#allocation7], 4
          %s486 = int_to_ptr.vmem [resolvable:$true] %s485
          %488 = dma.vmem_to_hbm [thread:$0]  %s486, 128, %s2, [#allocation4]
        $region66: #{tpu_custom_call.1} parent=27 // pred_fallthru
          _
        // Predicated region
        $region67: #{tpu_custom_call.1} parent=27 // pred_check
          %p489 = pneg %p109
        $region68: #{tpu_custom_call.1} parent=27 // pred_check_branch
          %491 = sbr.rel (%p489) target = $region70
        $region69: #{tpu_custom_call.1} parent=27 // pred_region
          %s493 = ssub.s32 128, 128
          %494 = vsyncadd [#allocation9], %s493
          %s496 = sshll.u32 [#allocation8], 4
          %s497 = int_to_ptr.vmem [resolvable:$true] %s496
          %499 = dma.vmem_to_hbm [thread:$0]  %s497, 128, %s3, [#allocation9]
        $region70: #{tpu_custom_call.1} parent=27 // pred_fallthru
          _
        // Predicated region
        $region71: #{tpu_custom_call.1} parent=27 // pred_check
          %p500 = pneg %p88
        $region72: #{tpu_custom_call.1} parent=27 // pred_check_branch
          %502 = sbr.rel (%p500) target = $region74
        $region73: #{tpu_custom_call.1} parent=27 // pred_region
          %503 = dma.done [#allocation4], 128
        $region74: #{tpu_custom_call.1} parent=27 // pred_fallthru
          _
        // Predicated region
        $region75: #{tpu_custom_call.1} parent=27 // pred_check
          %p504 = pneg %p109
        $region76: #{tpu_custom_call.1} parent=27 // pred_check_branch
          %506 = sbr.rel (%p504) target = $region78
        $region77: #{tpu_custom_call.1} parent=27 // pred_region
          %507 = dma.done [#allocation9], 128
        $region78: #{tpu_custom_call.1} parent=27 // pred_fallthru
          _
      $region28: #{tpu_custom_call.1} parent=5 // pred_fallthru
        _
      %p508 = scmp.le.s32.totalorder 2, %s18
      // Predicated region
      $region79: #{tpu_custom_call.1} parent=5 // pred_check
        %p509 = pneg %p508
      $region80: #{tpu_custom_call.1} parent=5 // pred_check_branch
        %511 = sbr.rel (%p509) target = $region82
      $region81: #{tpu_custom_call.1} parent=5 // pred_region
        %s512 = ssub.s32 %s18, 2
      $region82: #{tpu_custom_call.1} parent=5 // pred_fallthru
        _
    $region6: #{tpu_custom_call.1} parent=1 // loop_footer
      %s22 = sadd.s32 1, %s18
    $region7: #{tpu_custom_call.1} parent=1 // loop_footer_branch
      %17 = sbr.rel target = $region3
    $region8: #{tpu_custom_call.1} parent=1 // loop_exit
      _
    %513 = vsyncpa [#allocation3], 1
    %s514 = scalar_lea.sflag [#allocation3], 1
    %515 = vsyncpa %s514, 1
    %516 = vsyncpa [#allocation6], 1
    %s517 = scalar_lea.sflag [#allocation6], 1
    %518 = vsyncpa %s517, 1
    %519 = vsyncpa [#allocation4], 1
    %s520 = scalar_lea.sflag [#allocation4], 1
    %521 = vsyncpa %s520, 1
    %522 = vsyncpa [#allocation9], 1

</llo_original>
